<compile_context>
chip_gen: v7x
topology: tpu7x:2x2x1
jax: 0.10.0
libtpu: 0.0.40
codegen_flags: <defaults>
</compile_context>

<pallas_src>
import functools

import jax
import jax.numpy as jnp
import numpy as np
from jax.experimental import pallas as pl
from jax.experimental.pallas import tpu as pltpu


def _cdiv(a, b):
    return -(-a // b)


def _round_up(x, m):
    return _cdiv(x, m) * m


# ---------------------------------------------------------------------------
# Capability probe: some JAX versions reject pipeline_mode=pl.Buffered(n) on
# pallas_call BlockSpecs.  Probe once with a tiny kernel and cache the result;
# if unsupported we silently fall back to default (double) buffering, which is
# the previously-validated configuration.
# ---------------------------------------------------------------------------
_BUFFERED_PIPELINE_OK = None


def _buffered_pipeline_supported():
    global _BUFFERED_PIPELINE_OK
    if _BUFFERED_PIPELINE_OK is None:
        try:
            def _copy(x_ref, o_ref):
                o_ref[...] = x_ref[...]

            probe = pl.pallas_call(
                _copy,
                out_shape=jax.ShapeDtypeStruct((8, 128), jnp.float32),
                grid=(2,),
                in_specs=[pl.BlockSpec((8, 128), lambda i: (0, 0),
                                       pipeline_mode=pl.Buffered(1))],
                out_specs=pl.BlockSpec((8, 128), lambda i: (0, 0)),
            )
            jax.block_until_ready(probe(jnp.zeros((8, 128), jnp.float32)))
            _BUFFERED_PIPELINE_OK = True
        except Exception:
            _BUFFERED_PIPELINE_OK = False
    return _BUFFERED_PIPELINE_OK


# ---------------------------------------------------------------------------
# Per-generation tiling / VMEM configuration.
# ---------------------------------------------------------------------------
def _tpu_generation_config():
    kind = ""
    try:
        kind = jax.devices()[0].device_kind.lower()
    except Exception:
        pass
    if "v7" in kind or "7x" in kind:
        # 64 MiB VMEM, 2 TensorCores -> keep >=2 M-tiles for megacore sharding.
        return dict(vmem_cap=56 << 20, tm_target=512, min_m_tiles=2, in_buffers=2)
    if "v6" in kind:
        # 128 MiB VMEM -> bigger row tiles amortize per-grid-step overhead.
        return dict(vmem_cap=100 << 20, tm_target=1024, min_m_tiles=1, in_buffers=2)
    if "v5p" in kind:
        return dict(vmem_cap=100 << 20, tm_target=1024, min_m_tiles=1, in_buffers=2)
    if "v5" in kind:
        # v5e: lowest HBM BW -> deeper patch-input pipeline.
        return dict(vmem_cap=100 << 20, tm_target=1024, min_m_tiles=1, in_buffers=3)
    # Unknown generation: conservative (v7x-safe) defaults.
    return dict(vmem_cap=48 << 20, tm_target=512, min_m_tiles=1, in_buffers=2)


def _vmem_need_bytes(tm, k, fp, ep, f_chunk, in_buffers, w_buffers, out_bytes):
    patches = in_buffers * tm * k * 2                        # bf16 patch stream
    outputs = 2 * tm * ep * out_bytes                        # pipelined output
    weights = w_buffers * (k * fp * 2 + fp * 4 + fp * ep * 2 + ep * 4)
    temps = tm * f_chunk * (4 + 2) + tm * ep * 4             # feat f32+bf16, f32 acc
    return patches + outputs + weights + temps


# ---------------------------------------------------------------------------
# Pallas kernel: fused  (patches @ Wc + bc) -> ReLU -> (@ Wp) + bp,
# chunked over the F (feature_dim) axis to cap the live intermediate.
# ---------------------------------------------------------------------------
def _hybrid_embed_kernel(patches_ref, wc_ref, bc_ref, wp_ref, bp_ref, out_ref,
                         *, f_chunk):
    x = patches_ref[...]                                     # (TM, K) bf16
    f_total = wc_ref.shape[1]
    acc = None
    for c0 in range(0, f_total, f_chunk):                    # static unrolled loop
        c1 = min(c0 + f_chunk, f_total)
        # backbone conv expressed as matmul over im2col patches (f32 MXU acc)
        feat = jnp.dot(x, wc_ref[:, c0:c1], preferred_element_type=jnp.float32)
        feat = jnp.maximum(feat + bc_ref[:, c0:c1], 0.0)
        # HybridEmbed.proj partial product for this F-chunk
        part = jnp.dot(feat.astype(jnp.bfloat16), wp_ref[c0:c1, :],
                       preferred_element_type=jnp.float32)
        acc = part if acc is None else acc + part
    out_ref[...] = (acc + bp_ref[...]).astype(out_ref.dtype)


def hybrid_embed_forward(x_nchw, conv_w, conv_b, proj_w, proj_b, *, stride,
                         out_dtype=jnp.bfloat16):
    """x_nchw: (B, C, H, W) f32.  conv_w: (F, C, k, k), conv_b: (F,),
    proj_w: (E, F), proj_b: (E,).  Returns (B, N, E) in out_dtype,
    N = (H//k)*(W//k).  out_dtype=bf16 halves the dominant HBM writeback;
    pass jnp.float32 if the consumer needs full-precision output."""
    B, C, H, W = x_nchw.shape
    F_, Cw, kh, kw = conv_w.shape
    assert Cw == C and kh == kw == stride
    E, F_in = proj_w.shape
    assert F_in == F_
    Hp, Wp_ = H // stride, W // stride
    N = Hp * Wp_
    M = B * N
    K = C * stride * stride

    # ---- glue: im2col for the stride==kernel (non-overlapping) conv --------
    # Cast to bf16 FIRST so the transpose copy moves half the bytes; under jit
    # the convert/transpose/pad fuse into a single HBM pass before the kernel.
    # TODO(synk): fold this patch gather into the pallas_call itself (grid over
    # (B*Hp, Wp) tiles with an index_map on the (B, C, Hp, k, Wp, k) view) to
    # remove the remaining extra HBM pass over the image.
    patches = x_nchw.astype(jnp.bfloat16)
    patches = patches.reshape(B, C, Hp, stride, Wp_, stride)
    patches = patches.transpose(0, 2, 4, 1, 3, 5).reshape(M, K)

    # ---- weights: (F,C,k,k) -> (K,F);  (E,F) -> (F,E) ----------------------
    # K is left unpadded (full-dim block is legal; padding would only waste
    # HBM BW on the dominant patch stream).  F is padded to 128 lanes (weights
    # are resident, negligible bytes; padded cols give relu(0)=0 -> contribute
    # 0).  E is padded only when E > 128 so small embed dims do not inflate
    # the output writeback 4x.  Real HybridEmbed dims (F=2048, E=768) are
    # already 256-aligned, fully feeding the 256-wide v6e/v7x MXU.
    Fp = _round_up(F_, 128)
    Ep = E if E <= 128 else _round_up(E, 128)

    wc = conv_w.reshape(F_, K).T.astype(jnp.bfloat16)
    wp = proj_w.T.astype(jnp.bfloat16)
    bc = conv_b.reshape(1, F_).astype(jnp.float32)
    bp = proj_b.reshape(1, E).astype(jnp.float32)
    if Fp > F_:
        wc = jnp.pad(wc, ((0, 0), (0, Fp - F_)))
        bc = jnp.pad(bc, ((0, 0), (0, Fp - F_)))
        wp = jnp.pad(wp, ((0, Fp - F_), (0, 0)))
    if Ep > E:
        wp = jnp.pad(wp, ((0, 0), (0, Ep - E)))
        bp = jnp.pad(bp, ((0, 0), (0, Ep - E)))

    # ---- generation-aware tiling / buffering --------------------------------
    cfg = _tpu_generation_config()
    buffered_ok = _buffered_pipeline_supported()
    w_buffers = 1 if buffered_ok else 2            # resident weights: 1 buffer
    in_buffers = cfg["in_buffers"] if buffered_ok else 2
    out_bytes = jnp.dtype(out_dtype).itemsize
    f_chunk = min(Fp, 512)

    # Row tile TM: no double round-up -> at most 16*n_tiles padded rows.
    Mp0 = _round_up(M, 16)                         # bf16 sublane granularity
    TM = min(cfg["tm_target"], Mp0)
    if cfg["min_m_tiles"] > 1 and Mp0 >= 32:       # keep both v7x TCs busy
        TM = min(TM, _round_up(_cdiv(Mp0, cfg["min_m_tiles"]), 16))
    TM = _round_up(TM, 16)
    while TM > 64 and (_vmem_need_bytes(TM, K, Fp, Ep, f_chunk, in_buffers,
                                        w_buffers, out_bytes) + (8 << 20)
                       > cfg["vmem_cap"]):
        TM = _round_up(TM // 2, 16)
    n_tiles = _cdiv(Mp0, TM)
    TM = _round_up(_cdiv(Mp0, n_tiles), 16)        # re-balance over the grid
    Mp = n_tiles * TM

    if Mp > M:
        patches = jnp.pad(patches, ((0, Mp - M), (0, 0)))

    vmem_limit = int(min(
        cfg["vmem_cap"],
        max(_vmem_need_bytes(TM, K, Fp, Ep, f_chunk, in_buffers, w_buffers,
                             out_bytes) + (8 << 20), 32 << 20)))

    stream_kw, resident_kw = {}, {}
    if buffered_ok:
        resident_kw["pipeline_mode"] = pl.Buffered(1)        # no 2nd weight buf
        if in_buffers != 2:
            stream_kw["pipeline_mode"] = pl.Buffered(in_buffers)  # deeper on v5e

    flops = 2 * Mp * K * Fp + 2 * Mp * Fp * Ep
    bytes_accessed = (Mp * K * 2 + K * Fp * 2 + Fp * 4 + Fp * Ep * 2 + Ep * 4
                      + Mp * Ep * out_bytes)

    out = pl.pallas_call(
        functools.partial(_hybrid_embed_kernel, f_chunk=f_chunk),
        out_shape=jax.ShapeDtypeStruct((Mp, Ep), out_dtype),
        grid=(n_tiles,),
        in_specs=[
            pl.BlockSpec((TM, K), lambda i: (i, 0), **stream_kw),    # patch rows
            pl.BlockSpec((K, Fp), lambda i: (0, 0), **resident_kw),  # conv W
            pl.BlockSpec((1, Fp), lambda i: (0, 0), **resident_kw),  # conv b
            pl.BlockSpec((Fp, Ep), lambda i: (0, 0), **resident_kw), # proj W
            pl.BlockSpec((1, Ep), lambda i: (0, 0), **resident_kw),  # proj b
        ],
        out_specs=pl.BlockSpec((TM, Ep), lambda i: (i, 0)),
        compiler_params=pltpu.CompilerParams(
            dimension_semantics=("parallel",),               # megacore on v7x
            vmem_limit_bytes=vmem_limit),
        cost_estimate=pl.CostEstimate(flops=flops, transcendentals=0,
                                      bytes_accessed=bytes_accessed),
    )(patches, wc, bc, wp, bp)

    # strip padding; rows are ordered (b, h', w') == flatten(2).transpose(1,2)
    return out[:M, :E].reshape(B, N, E)


# ---------------------------------------------------------------------------
# Pure-JAX f32 reference (mirrors the PyTorch forward) for a sanity check
# ---------------------------------------------------------------------------
def reference_forward(x_nchw, conv_w, conv_b, proj_w, proj_b, *, stride):
    feat = jax.lax.conv_general_dilated(
        x_nchw, conv_w, window_strides=(stride, stride), padding="VALID",
        dimension_numbers=("NCHW", "OIHW", "NCHW"))
    feat = jnp.maximum(feat + conv_b[None, :, None, None], 0.0)   # backbone out
    B, F_, Hp, Wp_ = feat.shape
    x = feat.reshape(B, F_, Hp * Wp_).transpose(0, 2, 1)          # flatten(2).T
    return x @ proj_w.T + proj_b                                  # nn.Linear


if __name__ == "__main__":
    # Small shapes consistent with the module.
    B, C, H, W = 2, 4, 16, 16       # input NCHW
    stride = 4                      # backbone reduces 16x16 -> 4x4 feature map
    feature_dim = 8                 # backbone output channels
    embed_dim = 32                  # HybridEmbed embed_dim

    key = jax.random.PRNGKey(0)
    kx, kcw, kcb, kpw, kpb = jax.random.split(key, 5)
    x = jax.random.normal(kx, (B, C, H, W), dtype=jnp.float32)
    conv_w = jax.random.normal(kcw, (feature_dim, C, stride, stride), jnp.float32) * 0.1
    conv_b = jax.random.normal(kcb, (feature_dim,), jnp.float32) * 0.1
    proj_w = jax.random.normal(kpw, (embed_dim, feature_dim), jnp.float32) * 0.1
    proj_b = jax.random.normal(kpb, (embed_dim,), jnp.float32) * 0.1

    # Run the pipeline-mode capability probe once, outside jit tracing.
    _buffered_pipeline_supported()

    fwd = jax.jit(functools.partial(hybrid_embed_forward, stride=stride))
    out = jax.block_until_ready(fwd(x, conv_w, conv_b, proj_w, proj_b))

    ref = reference_forward(x, conv_w, conv_b, proj_w, proj_b, stride=stride)
    assert out.shape == (B, (H // stride) * (W // stride), embed_dim)
    # bf16 operands / bf16 output (f32 MXU accumulation) -> relaxed tolerance
    np.testing.assert_allclose(np.asarray(out).astype(np.float32),
                               np.asarray(ref), rtol=2e-2, atol=2e-2)

    print("KERNEL_OK")
</pallas_src>

<mosaic_0001>
module attributes {stable_mosaic.version = 11 : i64} {
  func.func @_copy(%arg0: i32, %arg1: memref<8x128xf32, #tpu.memory_space<vmem>>, %arg2: memref<8x128xf32, #tpu.memory_space<vmem>>) attributes {dimension_semantics = [#tpu.dimension_semantics<arbitrary>], iteration_bounds = array<i64: 2>, scalar_prefetch = 0 : i64, scratch_operands = 0 : i64, tpu.core_type = #tpu.core_type<tc>, window_params = [{pipeline_mode = #tpu.pipeline_mode<synchronous>, transform_indices = @transform_0, window_bounds = array<i64: 8, 128>}, {pipeline_mode = #tpu.pipeline_mode<synchronous>, transform_indices = @transform_1, window_bounds = array<i64: 8, 128>}]} {
    %c0 = arith.constant 0 : index
    %c0_0 = arith.constant 0 : index
    %0 = vector.load %arg1[%c0, %c0_0] : memref<8x128xf32, #tpu.memory_space<vmem>>, vector<8x128xf32>
    %c0_1 = arith.constant 0 : index
    %c0_2 = arith.constant 0 : index
    %1 = vector.load %arg2[%c0_1, %c0_2] : memref<8x128xf32, #tpu.memory_space<vmem>>, vector<8x128xf32>
    tpu.vector_store %arg2[%c0_1, %c0_2], %0 {strides = array<i32>} : memref<8x128xf32, #tpu.memory_space<vmem>>, vector<8x128xf32>,
    return
  }
  func.func @transform_0(%arg0: i32) -> (i32, i32) {
    %c0_i32 = arith.constant 0 : i32
    %c0_i32_0 = arith.constant 0 : i32
    %c0_i32_1 = arith.constant 0 : i32
    return %c0_i32, %c0_i32_0 : i32, i32
  }
  func.func @transform_1(%arg0: i32) -> (i32, i32) {
    %c0_i32 = arith.constant 0 : i32
    %c0_i32_0 = arith.constant 0 : i32
    %c0_i32_1 = arith.constant 0 : i32
    return %c0_i32, %c0_i32_0 : i32, i32
  }
}

module attributes {stable_mosaic.version = 11 : i64} {
  func.func @_hybrid_embed_kernel(%arg0: i32, %arg1: memref<32x64xbf16, #tpu.memory_space<vmem>>, %arg2: memref<64x128xbf16, #tpu.memory_space<vmem>>, %arg3: memref<1x128xf32, #tpu.memory_space<vmem>>, %arg4: memref<128x32xbf16, #tpu.memory_space<vmem>>, %arg5: memref<1x32xf32, #tpu.memory_space<vmem>>, %arg6: memref<32x32xbf16, #tpu.memory_space<vmem>>) attributes {dimension_semantics = [#tpu.dimension_semantics<parallel>], iteration_bounds = array<i64: 1>, scalar_prefetch = 0 : i64, scratch_operands = 0 : i64, tpu.core_type = #tpu.core_type<tc>, window_params = [{transform_indices = @transform_0, window_bounds = array<i64: 32, 64>}, {pipeline_mode = #tpu.pipeline_mode<synchronous>, transform_indices = @transform_1, window_bounds = array<i64: 64, 128>}, {pipeline_mode = #tpu.pipeline_mode<synchronous>, transform_indices = @transform_2, window_bounds = array<i64: 1, 128>}, {pipeline_mode = #tpu.pipeline_mode<synchronous>, transform_indices = @transform_3, window_bounds = array<i64: 128, 32>}, {pipeline_mode = #tpu.pipeline_mode<synchronous>, transform_indices = @transform_4, window_bounds = array<i64: 1, 32>}, {transform_indices = @transform_5, window_bounds = array<i64: 32, 32>}]} {
    %c0 = arith.constant 0 : index
    %c0_0 = arith.constant 0 : index
    %0 = vector.load %arg1[%c0, %c0_0] : memref<32x64xbf16, #tpu.memory_space<vmem>>, vector<32x64xbf16>
    %c0_1 = arith.constant 0 : index
    %c0_2 = arith.constant 0 : index
    %1 = vector.load %arg2[%c0_1, %c0_2] : memref<64x128xbf16, #tpu.memory_space<vmem>>, vector<64x128xbf16>
    %cst = arith.constant dense<0.000000e+00> : vector<32x128xf32>
    %2 = tpu.matmul %0, %1, %cst {dimension_numbers = #tpu.dot_dimension_numbers<[1], [0], [0], [1], [0, 0, 1, 1], [], []>} : vector<32x64xbf16>, vector<64x128xbf16>, vector<32x128xf32> -> vector<32x128xf32>
    %c0_3 = arith.constant 0 : index
    %c0_4 = arith.constant 0 : index
    %3 = vector.load %arg3[%c0_3, %c0_4] : memref<1x128xf32, #tpu.memory_space<vmem>>, vector<1x128xf32>
    %4 = vector.broadcast %3 : vector<1x128xf32> to vector<32x128xf32>
    %5 = arith.addf %2, %4 : vector<32x128xf32>
    %cst_5 = arith.constant 0.000000e+00 : f32
    %6 = vector.broadcast %cst_5 : f32 to vector<32x128xf32>
    %7 = arith.maximumf %5, %6 : vector<32x128xf32>
    %8 = arith.truncf %7 : vector<32x128xf32> to vector<32x128xbf16>
    %c0_6 = arith.constant 0 : index
    %c0_7 = arith.constant 0 : index
    %9 = vector.load %arg4[%c0_6, %c0_7] : memref<128x32xbf16, #tpu.memory_space<vmem>>, vector<128x32xbf16>
    %cst_8 = arith.constant dense<0.000000e+00> : vector<32x32xf32>
    %10 = tpu.matmul %8, %9, %cst_8 {dimension_numbers = #tpu.dot_dimension_numbers<[1], [0], [0], [1], [0, 0, 1, 1], [], []>} : vector<32x128xbf16>, vector<128x32xbf16>, vector<32x32xf32> -> vector<32x32xf32>
    %c0_9 = arith.constant 0 : index
    %c0_10 = arith.constant 0 : index
    %11 = vector.load %arg5[%c0_9, %c0_10] : memref<1x32xf32, #tpu.memory_space<vmem>>, vector<1x32xf32>
    %12 = vector.broadcast %11 : vector<1x32xf32> to vector<32x32xf32>
    %13 = arith.addf %10, %12 : vector<32x32xf32>
    %14 = arith.truncf %13 : vector<32x32xf32> to vector<32x32xbf16>
    %c0_11 = arith.constant 0 : index
    %c0_12 = arith.constant 0 : index
    %15 = vector.load %arg6[%c0_11, %c0_12] : memref<32x32xbf16, #tpu.memory_space<vmem>>, vector<32x32xbf16>
    tpu.vector_store %arg6[%c0_11, %c0_12], %14 {strides = array<i32>} : memref<32x32xbf16, #tpu.memory_space<vmem>>, vector<32x32xbf16>,
    return
  }
  func.func @transform_0(%arg0: i32) -> (i32, i32) {
    %c0_i32 = arith.constant 0 : i32
    %c0_i32_0 = arith.constant 0 : i32
    return %arg0, %c0_i32 : i32, i32
  }
  func.func @transform_1(%arg0: i32) -> (i32, i32) {
    %c0_i32 = arith.constant 0 : i32
    %c0_i32_0 = arith.constant 0 : i32
    %c0_i32_1 = arith.constant 0 : i32
    return %c0_i32, %c0_i32_0 : i32, i32
  }
  func.func @transform_2(%arg0: i32) -> (i32, i32) {
    %c0_i32 = arith.constant 0 : i32
    %c0_i32_0 = arith.constant 0 : i32
    %c0_i32_1 = arith.constant 0 : i32
    return %c0_i32, %c0_i32_0 : i32, i32
  }
  func.func @transform_3(%arg0: i32) -> (i32, i32) {
    %c0_i32 = arith.constant 0 : i32
    %c0_i32_0 = arith.constant 0 : i32
    %c0_i32_1 = arith.constant 0 : i32
    return %c0_i32, %c0_i32_0 : i32, i32
  }
  func.func @transform_4(%arg0: i32) -> (i32, i32) {
    %c0_i32 = arith.constant 0 : i32
    %c0_i32_0 = arith.constant 0 : i32
    %c0_i32_1 = arith.constant 0 : i32
    return %c0_i32, %c0_i32_0 : i32, i32
  }
  func.func @transform_5(%arg0: i32) -> (i32, i32) {
    %c0_i32 = arith.constant 0 : i32
    %c0_i32_0 = arith.constant 0 : i32
    return %arg0, %c0_i32 : i32, i32
  }
}

</mosaic_0001>

<llo_original>
// kernel: tpu_custom_call.1
$region0: #{tpu_custom_call.1}
  #allocation0 [shape = 'u32[]', space=smem, size = 0x4, offset = 0x4, fixed_abs, tag = 'smem constant byte address 0x4 - core index']
  #allocation1 [shape = 'u32[144,128]{1,0:T(1,128)}', space=vmem, size = 0x12000, scoped, tag = 'internal scratch']
  %s0 = inlined_call_operand.hbm [shape: f32[8,128], index: 0, kind: input, shape index: {}]
  %s1 = inlined_call_operand.hbm [shape: f32[8,128], index: 1, kind: output, shape index: {}]
  %s2 = sld [smem:[#allocation0]]
  $region41: #{tpu_custom_call.1} parent=0
    _
  %s4 = ssub.s32 1, %s2
  %s5 = scalar_select 0, %s4, %s2
  $region1: #{tpu_custom_call.1} parent=0
    #allocation2 [shape = 'u8[4096]{0}', space=vmem, size = 0x1000, scoped, tag = 'input window, operand 0, single buffered']
    #allocation3 [shape = 's32[2]{0}', space=sflag, size = 0x8, scoped, tag = 'scoped memory for tpu_custom_call.1']
    #allocation4 [shape = 's32[2]{0}', space=sflag, size = 0x8, scoped, tag = 'scoped memory for tpu_custom_call.1']
    #allocation5 [shape = 'u8[4096]{0}', space=vmem, size = 0x1000, scoped, tag = 'output window, operand 0, single buffered']
    %6 = vsyncpa [#allocation3], 0
    %7 = vsyncpa [#allocation4], 0
    loop: start=0, step=1, limit=4
    $region2: #{tpu_custom_call.1} parent=1 // loop_pre_header
      _
    $region3: #{tpu_custom_call.1} parent=1 // loop_header
      %s9 = sphi 0, %s13
      %p10 = scmp.ge.s32.totalorder %s9, 4
      %s17 = sphi 0, %s17
      %s19 = sphi 0, %s17
      %s20 = sphi 0, %s19
      %s34 = sphi 0, %s20
      %s38 = sphi 0, %s38
      %s40 = sphi 0, %s38
      %s41 = sphi 0, %s40
      %s55 = sphi 0, %s41
    $region4: #{tpu_custom_call.1} parent=1 // loop_header_branch
      %12 = sbr.rel (%p10) target = $region8
    $region5: #{tpu_custom_call.1} parent=1 // loop_body
      %s14 = ssub.s32 %s9, 1
      %s15 = ssub.s32 %s9, 2
      %s16 = sadd.s32 %s9, 1
      %s18 = sadd.s32 %s17, 1
      %p21 = scmp.eq.s32.totalorder %s9, 1
      %p22 = scmp.ne.s32.totalorder %s17, %s19
      %p23 = scmp.eq.s32.totalorder %s9, 0
      %p24 = por %p22, %p23
      %p25 = scmp.ne.s32.totalorder %s17, %s19
      %p26 = scmp.eq.s32.totalorder %s14, 1
      %p27 = por %p25, %p26
      %p28 = scmp.ne.s32.totalorder %s19, %s20
      %p29 = scmp.eq.s32.totalorder %s14, 0
      %p30 = por %p28, %p29
      %p31 = scmp.ne.s32.totalorder %s19, %s20
      %p32 = scmp.eq.s32.totalorder %s15, 1
      %p33 = por %p31, %p32
      %p35 = scmp.ne.s32.totalorder %s20, %s34
      %p36 = scmp.eq.s32.totalorder %s15, 0
      %p37 = por %p35, %p36
      %s39 = sadd.s32 %s38, 1
      %p42 = scmp.eq.s32.totalorder %s9, 1
      %p43 = scmp.ne.s32.totalorder %s38, %s40
      %p44 = scmp.eq.s32.totalorder %s9, 0
      %p45 = por %p43, %p44
      %p46 = scmp.ne.s32.totalorder %s38, %s40
      %p47 = scmp.eq.s32.totalorder %s14, 1
      %p48 = por %p46, %p47
      %p49 = scmp.ne.s32.totalorder %s40, %s41
      %p50 = scmp.eq.s32.totalorder %s14, 0
      %p51 = por %p49, %p50
      %p52 = scmp.ne.s32.totalorder %s40, %s41
      %p53 = scmp.eq.s32.totalorder %s15, 1
      %p54 = por %p52, %p53
      %p56 = scmp.ne.s32.totalorder %s41, %s55
      %p57 = scmp.eq.s32.totalorder %s15, 0
      %p58 = por %p56, %p57
      %p59 = scmp.le.s32.totalorder 1, %s9
      %p60 = scmp.lt.s32.totalorder %s9, 3
      %p61 = pnand %p59, %p60
      %p62 = pneg %p61
      // Predicated region
      $region9: #{tpu_custom_call.1} parent=5 // pred_check
        _
      $region10: #{tpu_custom_call.1} parent=5 // pred_check_branch
        %64 = sbr.rel (%p61) target = $region12
      $region11: #{tpu_custom_call.1} parent=5 // pred_region
        %s65 = ssub.s32 %s9, 1
        // Predicated region
        $region13: #{tpu_custom_call.1} parent=11 // pred_check
          %p66 = pneg %p30
        $region14: #{tpu_custom_call.1} parent=11 // pred_check_branch
          %68 = sbr.rel (%p66) target = $region16
        $region15: #{tpu_custom_call.1} parent=11 // pred_region
          %s70 = ssub.s32 128, 128
          %71 = vsyncadd [#allocation3], %s70
          %s73 = sshll.u32 [#allocation2], 4
          %s74 = int_to_ptr.vmem [resolvable:$true] %s73
          %76 = dma.hbm_to_vmem [thread:$0]  %s0, 128, %s74, [#allocation3]
        $region16: #{tpu_custom_call.1} parent=11 // pred_fallthru
          _
      $region12: #{tpu_custom_call.1} parent=5 // pred_fallthru
        _
      %p77 = scmp.lt.s32.totalorder %s9, 2
      // Predicated region
      $region17: #{tpu_custom_call.1} parent=5 // pred_check
        %p78 = pneg %p77
      $region18: #{tpu_custom_call.1} parent=5 // pred_check_branch
        %80 = sbr.rel (%p78) target = $region20
      $region19: #{tpu_custom_call.1} parent=5 // pred_region
        _
      $region20: #{tpu_custom_call.1} parent=5 // pred_fallthru
        _
      %p81 = scmp.le.s32.totalorder 1, %s9
      %p82 = scmp.lt.s32.totalorder %s9, 3
      %p83 = pnand %p81, %p82
      %p84 = pneg %p83
      // Predicated region
      $region21: #{tpu_custom_call.1} parent=5 // pred_check
        _
      $region22: #{tpu_custom_call.1} parent=5 // pred_check_branch
        %86 = sbr.rel (%p83) target = $region24
      $region23: #{tpu_custom_call.1} parent=5 // pred_region
        %s87 = ssub.s32 %s9, 1
        // Predicated region
        $region25: #{tpu_custom_call.1} parent=23 // pred_check
          %p88 = pneg %p30
        $region26: #{tpu_custom_call.1} parent=23 // pred_check_branch
          %90 = sbr.rel (%p88) target = $region28
        $region27: #{tpu_custom_call.1} parent=23 // pred_region
          %91 = dma.done [#allocation3], 128
        $region28: #{tpu_custom_call.1} parent=23 // pred_fallthru
          _
        %p92 = pneg %p30
        %p93 = pneg %p27
        %p94 = pneg %p51
        %p95 = pneg %p48
        %v96 = vld [vmem:[#allocation2] sm:$0xff]
        %97 = vst [vmem:[#allocation5] sm:$0xff] %v96
        // Predicated region
        $region29: #{tpu_custom_call.1} parent=23 // pred_check
          %p98 = pneg %p48
        $region30: #{tpu_custom_call.1} parent=23 // pred_check_branch
          %100 = sbr.rel (%p98) target = $region32
        $region31: #{tpu_custom_call.1} parent=23 // pred_region
          %s102 = ssub.s32 128, 128
          %103 = vsyncadd [#allocation4], %s102
          %s105 = sshll.u32 [#allocation5], 4
          %s106 = int_to_ptr.vmem [resolvable:$true] %s105
          %108 = dma.vmem_to_hbm [thread:$0]  %s106, 128, %s1, [#allocation4]
        $region32: #{tpu_custom_call.1} parent=23 // pred_fallthru
          _
        // Predicated region
        $region33: #{tpu_custom_call.1} parent=23 // pred_check
          %p109 = pneg %p48
        $region34: #{tpu_custom_call.1} parent=23 // pred_check_branch
          %111 = sbr.rel (%p109) target = $region36
        $region35: #{tpu_custom_call.1} parent=23 // pred_region
          %112 = dma.done [#allocation4], 128
        $region36: #{tpu_custom_call.1} parent=23 // pred_fallthru
          _
      $region24: #{tpu_custom_call.1} parent=5 // pred_fallthru
        _
      %p113 = scmp.le.s32.totalorder 2, %s9
      // Predicated region
      $region37: #{tpu_custom_call.1} parent=5 // pred_check
        %p114 = pneg %p113
      $region38: #{tpu_custom_call.1} parent=5 // pred_check_branch
        %116 = sbr.rel (%p114) target = $region40
      $region39: #{tpu_custom_call.1} parent=5 // pred_region
        %s117 = ssub.s32 %s9, 2
      $region40: #{tpu_custom_call.1} parent=5 // pred_fallthru
        _
    $region6: #{tpu_custom_call.1} parent=1 // loop_footer
      %s13 = sadd.s32 1, %s9
    $region7: #{tpu_custom_call.1} parent=1 // loop_footer_branch
      %8 = sbr.rel target = $region3
    $region8: #{tpu_custom_call.1} parent=1 // loop_exit
      _
    %118 = vsyncpa [#allocation3], 1
    %s119 = scalar_lea.sflag [#allocation3], 1
    %120 = vsyncpa %s119, 1
    %121 = vsyncpa [#allocation4], 1
    %s122 = scalar_lea.sflag [#allocation4], 1
    %123 = vsyncpa %s122, 1

// kernel: hybrid_embed_forward.1
$region0: #{hybrid_embed_forward.1}
  #allocation0 [shape = 'u32[]', space=smem, size = 0x4, offset = 0x4, fixed_abs, tag = 'smem constant byte address 0x4 - core index']
  #allocation1 [shape = 'u32[144,128]{1,0:T(1,128)}', space=vmem, size = 0x12000, scoped, tag = 'internal scratch']
  %s0 = inlined_call_operand.vmem [shape: bf16[32,64], index: 0, kind: input, shape index: {}]
  %s1 = inlined_call_operand.vmem [shape: bf16[64,128], index: 1, kind: input, shape index: {}]
  %s2 = inlined_call_operand.vmem [shape: f32[1,128], index: 2, kind: input, shape index: {}]
  %s3 = inlined_call_operand.vmem [shape: bf16[128,32], index: 3, kind: input, shape index: {}]
  %s4 = inlined_call_operand.vmem [shape: f32[1,32], index: 4, kind: input, shape index: {}]
  %s5 = inlined_call_operand.hbm [shape: bf16[32,32], index: 5, kind: output, shape index: {}]
  %s6 = sld [smem:[#allocation0]]
  $region30: #{hybrid_embed_forward.1} parent=0
    _
  %s8 = ssub.s32 1, %s6
  %s9 = scalar_select 0, %s8, %s6
  $region1: #{hybrid_embed_forward.1} parent=0
    #allocation2 [shape = 'u8[8192]{0}', space=vmem, size = 0x2000, scoped, tag = 'output window, operand 0, single buffered']
    #allocation3 [shape = 's32[1]{0}', space=sflag, size = 0x4, scoped, tag = 'scoped memory for hybrid_embed_forward.1']
    %10 = vsyncpa [#allocation3], 0
    // Predicated region
    $region2: #{hybrid_embed_forward.1} parent=1 // pred_check
      _
    $region3: #{hybrid_embed_forward.1} parent=1 // pred_check_branch
      %12 = sbr.rel (0) target = $region5
    $region4: #{hybrid_embed_forward.1} parent=1 // pred_region
      _
    $region5: #{hybrid_embed_forward.1} parent=1 // pred_fallthru
      _
    // Predicated region
    $region6: #{hybrid_embed_forward.1} parent=1 // pred_check
      _
    $region7: #{hybrid_embed_forward.1} parent=1 // pred_check_branch
      %14 = sbr.rel (0) target = $region9
    $region8: #{hybrid_embed_forward.1} parent=1 // pred_region
      _
    $region9: #{hybrid_embed_forward.1} parent=1 // pred_fallthru
      _
    // Predicated region
    $region10: #{hybrid_embed_forward.1} parent=1 // pred_check
      _
    $region11: #{hybrid_embed_forward.1} parent=1 // pred_check_branch
      %16 = sbr.rel (0) target = $region13
    $region12: #{hybrid_embed_forward.1} parent=1 // pred_region
      _
    $region13: #{hybrid_embed_forward.1} parent=1 // pred_fallthru
      _
    // Predicated region
    $region14: #{hybrid_embed_forward.1} parent=1 // pred_check
      _
    $region15: #{hybrid_embed_forward.1} parent=1 // pred_check_branch
      %18 = sbr.rel (0) target = $region17
    $region16: #{hybrid_embed_forward.1} parent=1 // pred_region
      _
    $region17: #{hybrid_embed_forward.1} parent=1 // pred_fallthru
      _
    // Predicated region
    $region18: #{hybrid_embed_forward.1} parent=1 // pred_check
      _
    $region19: #{hybrid_embed_forward.1} parent=1 // pred_check_branch
      %20 = sbr.rel (0) target = $region21
    $region20: #{hybrid_embed_forward.1} parent=1 // pred_region
      _
    $region21: #{hybrid_embed_forward.1} parent=1 // pred_fallthru
      _
    %v22 = vld [vmem:[%s0] sm:$0xf]
    %v23 = vld [vmem:[%s0 + $0x4] sm:$0xf]
    %v24 = vld [vmem:[%s0 + $0x8] sm:$0xf]
    %v25 = vld [vmem:[%s0 + $0xc] sm:$0xf]
    %v26 = vld [vmem:[%s1] sm:$0xf]
    %v27 = vld [vmem:[%s1 + $0x4] sm:$0xf]
    %v28 = vld [vmem:[%s1 + $0x8] sm:$0xf]
    %v29 = vld [vmem:[%s1 + $0xc] sm:$0xf]
    %v30 = vld [vmem:[%s1 + $0x10] sm:$0xf]
    %v31 = vld [vmem:[%s1 + $0x14] sm:$0xf]
    %v32 = vld [vmem:[%s1 + $0x18] sm:$0xf]
    %v33 = vld [vmem:[%s1 + $0x1c] sm:$0xf]
    %v34 = vld [vmem:[%s2] sm:$0x1]
    %v36 = vlaneseq
    %v37 = vshrl.u32 %v36, 7
    %v38 = vsub.s32 0, %v37
    %v39 = vrot.slane %v34, %v38
    %v45 = vunpack.c.l.b16 %v22
    %v46 = vunpack.c.l.b16 %v23
    %v47 = vunpack.c.l.b16 %v24
    %v48 = vunpack.c.l.b16 %v25
    %v49 = vpack.c.b16 %v46, %v45
    %v50 = vpack.c.b16 %v48, %v47
    %v59 = vunpack.c.l.b16 %v26
    %v60 = vunpack.c.l.b16 %v27
    %v61 = vunpack.c.l.b16 %v28
    %v62 = vunpack.c.l.b16 %v29
    %v63 = vunpack.c.l.b16 %v30
    %v64 = vunpack.c.l.b16 %v31
    %v65 = vunpack.c.l.b16 %v32
    %v66 = vunpack.c.l.b16 %v33
    %v67 = vpack.c.b16 %v60, %v59
    %v68 = vpack.c.b16 %v62, %v61
    %v69 = vpack.c.b16 %v64, %v63
    %v70 = vpack.c.b16 %v66, %v65
    %vm75 = vcmask 523264
    %v77 = vsel %vm75, %v49, 0
    %v80 = vsel %vm75, %v50, 0
    %82 = vmatprep.subr.bf16.mxu0 0
    %83 = vmatpush1.bf16.msra.mxu0 %v67
    %84 = vmatprep.subr.bf16.mxu0 0
    %85 = vmatpush1.bf16.msra.mxu0 %v68
    %86 = vmatprep.subr.bf16.mxu0 0
    %87 = vmatpush1.bf16.msra.mxu0 %v69
    %88 = vmatprep.subr.bf16.mxu0 0
    %89 = vmatpush1.bf16.msra.mxu0 %v70
    %90 = vmatprep.subr.bf16.mxu0 0
    %91 = vmatpush1.bf16.msra.mxu0 0
    %92 = vmatprep.subr.bf16.mxu0 0
    %93 = vmatpush1.bf16.msra.mxu0 0
    %94 = vmatprep.subr.bf16.mxu0 0
    %95 = vmatpush1.bf16.msra.mxu0 0
    %96 = vmatprep.subr.bf16.mxu0 0
    %97 = vmatpush1.bf16.msra.mxu0 0
    %98 = vmatprep.subr.bf16.mxu0 0
    %99 = vmatpush1.bf16.msra.mxu0 0
    %100 = vmatprep.subr.bf16.mxu0 0
    %101 = vmatpush1.bf16.msra.mxu0 0
    %102 = vmatprep.subr.bf16.mxu0 0
    %103 = vmatpush1.bf16.msra.mxu0 0
    %104 = vmatprep.subr.bf16.mxu0 0
    %105 = vmatpush1.bf16.msra.mxu0 0
    %106 = vmatprep.subr.bf16.mxu0 0
    %107 = vmatpush1.bf16.msra.mxu0 0
    %108 = vmatprep.subr.bf16.mxu0 0
    %109 = vmatpush1.bf16.msra.mxu0 0
    %110 = vmatprep.subr.bf16.mxu0 0
    %111 = vmatpush1.bf16.msra.mxu0 0
    %112 = vmatprep.subr.bf16.mxu0 0
    %113 = vmatpush1.bf16.msra.mxu0 0
    %114 = vmatprep.mubr.bf16.mxu0 0
    %115 = vmatmul.mubr.bf16.gmra.mrb[0].mxu0 %v77
    %v116 = vpop.f32.mrb[0].mxu0
    %v117 = vadd.f32 %v39, %v116
    %v118 = vpop.f32.mrb[0].mxu0
    %v119 = vpop.f32.mrb[0].mxu0
    %v120 = vadd.f32 %v39, %v119
    %v121 = vpop.f32.mrb[0].mxu0
    %122 = vmatprep.mubr.bf16.mxu0 0
    %123 = vmatmul.mubr.bf16.gmra.mrb[0].mxu0 %v80
    %v124 = vpop.f32.mrb[0].mxu0
    %v125 = vadd.f32 %v39, %v124
    %v126 = vpop.f32.mrb[0].mxu0
    %v127 = vpop.f32.mrb[0].mxu0
    %v128 = vadd.f32 %v39, %v127
    %v129 = vpop.f32.mrb[0].mxu0
    %130 = vdwg.mxu0
    %v131 = vmax.f32 %v117, 0.0
    %v132 = vmax.f32 %v120, 0.0
    %v133 = vmax.f32 %v125, 0.0
    %v134 = vmax.f32 %v128, 0.0
    %v135 = vpack.c.bf16 %v132, %v131
    %v136 = vpack.c.bf16 %v134, %v133
    %v137 = vld [vmem:[%s3] sm:$0xf]
    %v138 = vld [vmem:[%s3 + $0x4] sm:$0xf]
    %v139 = vld [vmem:[%s3 + $0x8] sm:$0xf]
    %v140 = vld [vmem:[%s3 + $0xc] sm:$0xf]
    %v141 = vld [vmem:[%s3 + $0x10] sm:$0xf]
    %v142 = vld [vmem:[%s3 + $0x14] sm:$0xf]
    %v143 = vld [vmem:[%s3 + $0x18] sm:$0xf]
    %v144 = vld [vmem:[%s3 + $0x1c] sm:$0xf]
    %v145 = vld [vmem:[%s3 + $0x20] sm:$0xf]
    %v146 = vld [vmem:[%s3 + $0x24] sm:$0xf]
    %v147 = vld [vmem:[%s3 + $0x28] sm:$0xf]
    %v148 = vld [vmem:[%s3 + $0x2c] sm:$0xf]
    %v149 = vld [vmem:[%s3 + $0x30] sm:$0xf]
    %v150 = vld [vmem:[%s3 + $0x34] sm:$0xf]
    %v151 = vld [vmem:[%s3 + $0x38] sm:$0xf]
    %v152 = vld [vmem:[%s3 + $0x3c] sm:$0xf]
    %v153 = vld [vmem:[%s4] sm:$0x1]
    %v155 = vlaneseq
    %v156 = vshrl.u32 %v155, 7
    %v157 = vsub.s32 0, %v156
    %v158 = vrot.slane %v153, %v157
    %v176 = vunpack.c.l.b16 %v137
    %v177 = vunpack.c.l.b16 %v138
    %v178 = vunpack.c.l.b16 %v139
    %v179 = vunpack.c.l.b16 %v140
    %v180 = vunpack.c.l.b16 %v141
    %v181 = vunpack.c.l.b16 %v142
    %v182 = vunpack.c.l.b16 %v143
    %v183 = vunpack.c.l.b16 %v144
    %v184 = vunpack.c.l.b16 %v145
    %v185 = vunpack.c.l.b16 %v146
    %v186 = vunpack.c.l.b16 %v147
    %v187 = vunpack.c.l.b16 %v148
    %v188 = vunpack.c.l.b16 %v149
    %v189 = vunpack.c.l.b16 %v150
    %v190 = vunpack.c.l.b16 %v151
    %v191 = vunpack.c.l.b16 %v152
    %v192 = vpack.c.b16 %v177, %v176
    %v193 = vpack.c.b16 %v179, %v178
    %v194 = vpack.c.b16 %v181, %v180
    %v195 = vpack.c.b16 %v183, %v182
    %v196 = vpack.c.b16 %v185, %v184
    %v197 = vpack.c.b16 %v187, %v186
    %v198 = vpack.c.b16 %v189, %v188
    %v199 = vpack.c.b16 %v191, %v190
    %208 = vmatprep.subr.bf16.mxu0 0
    %209 = vmatpush1.bf16.msra.mxu0 %v192
    %210 = vmatprep.subr.bf16.mxu0 0
    %211 = vmatpush1.bf16.msra.mxu0 %v193
    %212 = vmatprep.subr.bf16.mxu0 0
    %213 = vmatpush1.bf16.msra.mxu0 %v194
    %214 = vmatprep.subr.bf16.mxu0 0
    %215 = vmatpush1.bf16.msra.mxu0 %v195
    %216 = vmatprep.subr.bf16.mxu0 0
    %217 = vmatpush1.bf16.msra.mxu0 %v196
    %218 = vmatprep.subr.bf16.mxu0 0
    %219 = vmatpush1.bf16.msra.mxu0 %v197
    %220 = vmatprep.subr.bf16.mxu0 0
    %221 = vmatpush1.bf16.msra.mxu0 %v198
    %222 = vmatprep.subr.bf16.mxu0 0
    %223 = vmatpush1.bf16.msra.mxu0 %v199
    %224 = vmatprep.subr.bf16.mxu0 0
    %225 = vmatpush1.bf16.msra.mxu0 0
    %226 = vmatprep.subr.bf16.mxu0 0
    %227 = vmatpush1.bf16.msra.mxu0 0
    %228 = vmatprep.subr.bf16.mxu0 0
    %229 = vmatpush1.bf16.msra.mxu0 0
    %230 = vmatprep.subr.bf16.mxu0 0
    %231 = vmatpush1.bf16.msra.mxu0 0
    %232 = vmatprep.subr.bf16.mxu0 0
    %233 = vmatpush1.bf16.msra.mxu0 0
    %234 = vmatprep.subr.bf16.mxu0 0
    %235 = vmatpush1.bf16.msra.mxu0 0
    %236 = vmatprep.subr.bf16.mxu0 0
    %237 = vmatpush1.bf16.msra.mxu0 0
    %238 = vmatprep.subr.bf16.mxu0 0
    %239 = vmatpush1.bf16.msra.mxu0 0
    %240 = vmatprep.mubr.bf16.mxu0 0
    %241 = vmatmul.mubr.bf16.gmra.mrb[0].mxu0 %v135
    %v242 = vpop.f32.mrb[0].mxu0
    %v243 = vadd.f32 %v158, %v242
    %v244 = vpop.f32.mrb[0].mxu0
    %v245 = vpop.f32.mrb[0].mxu0
    %v246 = vadd.f32 %v158, %v245
    %v247 = vpop.f32.mrb[0].mxu0
    %248 = vmatprep.mubr.bf16.mxu0 0
    %249 = vmatmul.mubr.bf16.gmra.mrb[0].mxu0 %v136
    %v250 = vpop.f32.mrb[0].mxu0
    %v251 = vadd.f32 %v158, %v250
    %v252 = vpop.f32.mrb[0].mxu0
    %v253 = vpop.f32.mrb[0].mxu0
    %v254 = vadd.f32 %v158, %v253
    %v255 = vpop.f32.mrb[0].mxu0
    %256 = vdwg.mxu0
    %v257 = vpack.c.bf16 %v246, %v243
    %v258 = vpack.c.bf16 %v254, %v251
    %v261 = vunpack.c.l.b16 %v257
    %v262 = vunpack.c.h.b16 %v257
    %v263 = vunpack.c.l.b16 %v258
    %v264 = vunpack.c.h.b16 %v258
    %v265 = vpack.c.b16 %v261, %v261
    %v266 = vpack.c.b16 %v262, %v262
    %v267 = vpack.c.b16 %v263, %v263
    %v268 = vpack.c.b16 %v264, %v264
    %vm273 = vcmask 257024
    %274 = vst.msk [vmem:[#allocation2] sm:$0xf] %vm273, %v265
    %275 = vst.msk [vmem:[#allocation2 + $0x4] sm:$0xf] %vm273, %v266
    %276 = vst.msk [vmem:[#allocation2 + $0x8] sm:$0xf] %vm273, %v267
    %277 = vst.msk [vmem:[#allocation2 + $0xc] sm:$0xf] %vm273, %v268
    // Predicated region
    $region22: #{hybrid_embed_forward.1} parent=1 // pred_check
      _
    $region23: #{hybrid_embed_forward.1} parent=1 // pred_check_branch
      %279 = sbr.rel (0) target = $region25
    $region24: #{hybrid_embed_forward.1} parent=1 // pred_region
      %s281 = ssub.s32 256, 256
      %282 = vsyncadd [#allocation3], %s281
      %s283 = sshll.u32 [#allocation2], 4
      %s284 = int_to_ptr.vmem [resolvable:$true] %s283
      %289 = dma.vmem_to_hbm [thread:$0]  %s284, 256, %s5, [#allocation3], 64, 64, 4
    $region25: #{hybrid_embed_forward.1} parent=1 // pred_fallthru
      _
    // Predicated region
    $region26: #{hybrid_embed_forward.1} parent=1 // pred_check
      _
    $region27: #{hybrid_embed_forward.1} parent=1 // pred_check_branch
      %291 = sbr.rel (0) target = $region29
    $region28: #{hybrid_embed_forward.1} parent=1 // pred_region
      %292 = dma.done [#allocation3], 256
    $region29: #{hybrid_embed_forward.1} parent=1 // pred_fallthru
      _
    %293 = vsyncpa [#allocation3], 1

</llo_original>
